<compile_context>
chip_gen: v7x
topology: tpu7x:2x2x1
jax: 0.10.0
libtpu: 0.0.40
codegen_flags: <defaults>
</compile_context>

<pallas_src>
import math

import jax
import jax.numpy as jnp
from jax.experimental import pallas as pl
from jax.experimental.pallas import tpu as pltpu


# -----------------------------------------------------------------------------
# Kernel: one (TM, KF) x (KF, TE) tile of  y = x @ W_T + b  (f32 accumulate).
# -----------------------------------------------------------------------------
def lin_decoder_kernel(x_ref, w_ref, b_ref, o_ref):
    # x_ref : (TM, KF)  VMEM  folded activation tile
    # w_ref : (KF, TE)  VMEM  (K, E)-layout (block-diag when folded) weight tile
    # b_ref : (1,  TE)  VMEM  bias tile
    # o_ref : (TM, TE)  VMEM  lane-dense output tile
    acc = jnp.dot(x_ref[...], w_ref[...], preferred_element_type=jnp.float32)
    o_ref[...] = (acc + b_ref[...].astype(jnp.float32)).astype(o_ref.dtype)


def _fold_factor(N, K, E, max_fold=8):
    """Smallest row-fold F making the folded output width F*E a multiple of 128
    (lane-dense, unmasked stores), optionally grown so the folded input width
    F*K is lane-dense too. Returns 1 when folding is impossible/unnecessary."""
    if E % 128 == 0:
        return 1
    f = 128 // math.gcd(E, 128)
    if N % f != 0:
        return 1
    while (f * K) % 128 != 0 and 2 * f <= max_fold and N % (2 * f) == 0:
        f *= 2
    return f


def lin_decoder(x, weight, bias, *, tm=2048, tn=512, force_pallas=False):
    """y = x @ weight.T + bias  (PyTorch nn.Linear semantics).

    x:      (N, bottleneck_dim)
    weight: (emb_dim, bottleneck_dim)   native PyTorch layout
    bias:   (emb_dim,)
    returns (N, emb_dim) in x.dtype
    """
    N, K = x.shape
    E, K2 = weight.shape
    assert K == K2, "feature-dim mismatch"
    assert tm % 8 == 0 and tn % 128 == 0, "tm must be a multiple of 8, tn of 128"

    out_dtype = x.dtype
    osize = x.dtype.itemsize

    # Tiny-problem fast path: a standalone pallas_call is pure dispatch latency
    # at the module's real shapes; let XLA fuse the dot instead.
    # TODO(synk): fuse into the surrounding autoencoder Pallas kernel instead.
    if not force_pallas and N * E <= 32768:
        return (x @ weight.T + bias).astype(out_dtype)

    # ---- One-time parameter repack (hoist to parameter-load time in prod) ----
    w_t = weight.T  # (K, E): canonical (M,K)@(K,E), lane-dense RHS, no per-tile vxpose

    F = _fold_factor(N, K, E)
    if F > 1 and (F * K) * (F * E) * w_t.dtype.itemsize > (4 << 20):
        F = 1  # block-diagonal repack would be too large to keep VMEM-resident
    if F > 1:
        # Fold F consecutive batch rows: x -> (N/F, F*K), W -> blockdiag of F
        # copies of w_t (F*K, F*E), b -> tiled F times. Folded output (N/F, F*E)
        # is bit-identical to y.reshape(N/F, F*E). Extra MACs on the zero
        # blocks are free: the kernel is store/DMA-bound, MXU is ~idle at K=32.
        w_k = jnp.kron(jnp.eye(F, dtype=w_t.dtype), w_t)        # (F*K, F*E)
        b_k = jnp.tile(bias, F).reshape(1, F * E)
        x_k = x.reshape(N // F, F * K)
    else:
        w_k = w_t
        b_k = bias.reshape(1, E)
        x_k = x

    NM, KF = x_k.shape
    EF = w_k.shape[1]

    # ---- Tile selection -------------------------------------------------------
    TE = EF if EF <= tn else tn
    if NM <= 8:
        TM = NM
    elif NM <= tm:
        # >= 2 grid steps along the parallel M axis -> both v7x TensorCores
        # get work; harmless on single-TC v5e/v6e.
        TM = min(((pl.cdiv(NM, 2) + 7) // 8) * 8, NM)
    else:
        TM = tm

    # Keep double-buffered blocks under v5e's 16 MiB default scoped-VMEM limit
    # (ample headroom on v6e/v7x too).
    budget = 12 << 20
    while TM > 8:
        per_call = (2 * (TM * KF * x_k.dtype.itemsize + TM * TE * osize)
                    + 2 * (KF * TE * w_k.dtype.itemsize + TE * b_k.dtype.itemsize))
        if per_call <= budget:
            break
        TM = max(8, ((TM // 2) // 8) * 8)

    # E axis OUTER, M axis inner: weight/bias block indices are constant across
    # the inner M steps, so Pallas DMAs them once per j and keeps them resident.
    grid = (pl.cdiv(EF, TE), pl.cdiv(NM, TM))

    cost = pl.CostEstimate(
        flops=2 * N * K * E,
        transcendentals=0,
        bytes_accessed=(x.size * x.dtype.itemsize
                        + weight.size * weight.dtype.itemsize
                        + bias.size * bias.dtype.itemsize
                        + N * E * osize),
    )

    y_k = pl.pallas_call(
        lin_decoder_kernel,
        out_shape=jax.ShapeDtypeStruct((NM, EF), out_dtype),
        grid_spec=pltpu.PrefetchScalarGridSpec(
            num_scalar_prefetch=0,
            grid=grid,
            in_specs=[
                pl.BlockSpec((TM, KF), lambda j, i: (i, 0)),   # x tile: varies with i
                pl.BlockSpec((KF, TE), lambda j, i: (0, j)),   # weight: constant over i
                pl.BlockSpec((1, TE), lambda j, i: (0, j)),    # bias:   constant over i
            ],
            out_specs=pl.BlockSpec((TM, TE), lambda j, i: (i, j)),
        ),
        compiler_params=pltpu.CompilerParams(
            # Both axes independent -> shard across TensorCores on v7x.
            dimension_semantics=("parallel", "parallel"),
        ),
        cost_estimate=cost,
    )(x_k, w_k, b_k)

    return y_k.reshape(N, E)


if __name__ == "__main__":
    # Shapes implied by the module: emb_dim (output), bottleneck_dim (input).
    emb_dim = 64            # params.emb_dim
    bottleneck_dim = 32     # params.emb_dim_autoenc_A (lang_A=True)

    key = jax.random.PRNGKey(0)
    kx, kw, kb, kx2 = jax.random.split(key, 4)

    # Deterministic init mimicking nn.Linear default U(-1/sqrt(in), 1/sqrt(in)).
    bound = 1.0 / (bottleneck_dim ** 0.5)
    weight = jax.random.uniform(
        kw, (emb_dim, bottleneck_dim), jnp.float32, minval=-bound, maxval=bound
    )
    bias = jax.random.uniform(
        kb, (emb_dim,), jnp.float32, minval=-bound, maxval=bound
    )

    # Case 1: module-sized tiny batch — exercise both the XLA fast path and the
    # single-block Pallas path.
    x_small = jax.random.normal(kx, (8, bottleneck_dim), dtype=jnp.float32)
    ref_small = x_small @ weight.T + bias
    y_fast = jax.block_until_ready(lin_decoder(x_small, weight, bias))
    y_small = jax.block_until_ready(
        lin_decoder(x_small, weight, bias, force_pallas=True)
    )
    assert y_fast.shape == (8, emb_dim) and y_small.shape == (8, emb_dim)
    assert jnp.allclose(y_fast, ref_small, atol=1e-5, rtol=1e-5)
    assert jnp.allclose(y_small, ref_small, atol=1e-5, rtol=1e-5)

    # Case 2: larger batch — folded (F=4): x (1024,128) @ blockdiag W (128,256)
    # -> lane-dense y (1024,256), 2 parallel M-tiles, weight DMA'd once.
    x_big = jax.random.normal(kx2, (4096, bottleneck_dim), dtype=jnp.float32)
    ref_big = x_big @ weight.T + bias
    y_big = jax.block_until_ready(lin_decoder(x_big, weight, bias))
    assert y_big.shape == (4096, emb_dim)
    assert jnp.allclose(y_big, ref_big, atol=1e-5, rtol=1e-5)

    print("KERNEL_OK")
</pallas_src>

<mosaic_0001>
module attributes {stable_mosaic.version = 11 : i64} {
  func.func @lin_decoder_kernel(%arg0: i32, %arg1: i32, %arg2: memref<2x128xf32, #tpu.memory_space<vmem>>, %arg3: memref<128x256xf32, #tpu.memory_space<vmem>>, %arg4: memref<1x256xf32, #tpu.memory_space<vmem>>, %arg5: memref<2x256xf32, #tpu.memory_space<vmem>>) attributes {dimension_semantics = [#tpu.dimension_semantics<parallel>, #tpu.dimension_semantics<parallel>], iteration_bounds = array<i64: 1, 1>, scalar_prefetch = 0 : i64, scratch_operands = 0 : i64, tpu.core_type = #tpu.core_type<tc>, window_params = [{transform_indices = @transform_0, window_bounds = array<i64: 2, 128>}, {transform_indices = @transform_1, window_bounds = array<i64: 128, 256>}, {transform_indices = @transform_2, window_bounds = array<i64: 1, 256>}, {transform_indices = @transform_3, window_bounds = array<i64: 2, 256>}]} {
    %c0 = arith.constant 0 : index
    %c0_0 = arith.constant 0 : index
    %0 = vector.load %arg2[%c0, %c0_0] : memref<2x128xf32, #tpu.memory_space<vmem>>, vector<2x128xf32>
    %c0_1 = arith.constant 0 : index
    %c0_2 = arith.constant 0 : index
    %1 = vector.load %arg3[%c0_1, %c0_2] : memref<128x256xf32, #tpu.memory_space<vmem>>, vector<128x256xf32>
    %cst = arith.constant dense<0.000000e+00> : vector<2x256xf32>
    %2 = tpu.matmul %0, %1, %cst {dimension_numbers = #tpu.dot_dimension_numbers<[1], [0], [0], [1], [0, 0, 1, 1], [], []>} : vector<2x128xf32>, vector<128x256xf32>, vector<2x256xf32> -> vector<2x256xf32>
    %c0_3 = arith.constant 0 : index
    %c0_4 = arith.constant 0 : index
    %3 = vector.load %arg4[%c0_3, %c0_4] : memref<1x256xf32, #tpu.memory_space<vmem>>, vector<1x256xf32>
    %4 = vector.broadcast %3 : vector<1x256xf32> to vector<2x256xf32>
    %5 = arith.addf %2, %4 : vector<2x256xf32>
    %c0_5 = arith.constant 0 : index
    %c0_6 = arith.constant 0 : index
    %6 = vector.load %arg5[%c0_5, %c0_6] : memref<2x256xf32, #tpu.memory_space<vmem>>, vector<2x256xf32>
    tpu.vector_store %arg5[%c0_5, %c0_6], %5 {strides = array<i32>} : memref<2x256xf32, #tpu.memory_space<vmem>>, vector<2x256xf32>,
    return
  }
  func.func @transform_0(%arg0: i32, %arg1: i32) -> (i32, i32) {
    %c0_i32 = arith.constant 0 : i32
    %c0_i32_0 = arith.constant 0 : i32
    return %arg1, %c0_i32 : i32, i32
  }
  func.func @transform_1(%arg0: i32, %arg1: i32) -> (i32, i32) {
    %c0_i32 = arith.constant 0 : i32
    %c0_i32_0 = arith.constant 0 : i32
    return %c0_i32, %arg0 : i32, i32
  }
  func.func @transform_2(%arg0: i32, %arg1: i32) -> (i32, i32) {
    %c0_i32 = arith.constant 0 : i32
    %c0_i32_0 = arith.constant 0 : i32
    return %c0_i32, %arg0 : i32, i32
  }
  func.func @transform_3(%arg0: i32, %arg1: i32) -> (i32, i32) {
    %c0_i32 = arith.constant 0 : i32
    return %arg1, %arg0 : i32, i32
  }
}

</mosaic_0001>

<llo_original>
// kernel: tpu_custom_call.1
$region0: #{tpu_custom_call.1}
  #allocation0 [shape = 'u32[]', space=smem, size = 0x4, offset = 0x4, fixed_abs, tag = 'smem constant byte address 0x4 - core index']
  #allocation1 [shape = 'u32[144,128]{1,0:T(1,128)}', space=vmem, size = 0x12000, scoped, tag = 'internal scratch']
  %s0 = inlined_call_operand.hbm [shape: f32[2,128], index: 0, kind: input, shape index: {}]
  %s1 = inlined_call_operand.hbm [shape: f32[128,256], index: 1, kind: input, shape index: {}]
  %s2 = inlined_call_operand.vmem [shape: f32[1,256], index: 2, kind: input, shape index: {}]
  %s3 = inlined_call_operand.hbm [shape: f32[2,256], index: 3, kind: output, shape index: {}]
  %s4 = sld [smem:[#allocation0]]
  $region30: #{tpu_custom_call.1} parent=0
    _
  %s6 = ssub.s32 1, %s4
  %s7 = scalar_select 0, %s6, %s4
  $region1: #{tpu_custom_call.1} parent=0
    #allocation2 [shape = 'u8[1024]{0}', space=vmem, size = 0x400, scoped, tag = 'input window, operand 0, single buffered']
    #allocation3 [shape = 's32[1]{0}', space=sflag, size = 0x4, scoped, tag = 'scoped memory for tpu_custom_call.1']
    #allocation4 [shape = 's32[1]{0}', space=sflag, size = 0x4, scoped, tag = 'scoped memory for tpu_custom_call.1']
    #allocation5 [shape = 'u8[131072]{0}', space=vmem, size = 0x20000, scoped, tag = 'input window, operand 1, single buffered']
    #allocation6 [shape = 's32[1]{0}', space=sflag, size = 0x4, scoped, tag = 'scoped memory for tpu_custom_call.1']
    #allocation7 [shape = 'u8[2048]{0}', space=vmem, size = 0x800, scoped, tag = 'output window, operand 0, single buffered']
    %8 = vsyncpa [#allocation3], 0
    %9 = vsyncpa [#allocation6], 0
    %10 = vsyncpa [#allocation4], 0
    // Predicated region
    $region2: #{tpu_custom_call.1} parent=1 // pred_check
      _
    $region3: #{tpu_custom_call.1} parent=1 // pred_check_branch
      %12 = sbr.rel (0) target = $region5
    $region4: #{tpu_custom_call.1} parent=1 // pred_region
      %s14 = ssub.s32 32, 32
      %15 = vsyncadd [#allocation3], %s14
      %s17 = sshll.u32 [#allocation2], 4
      %s18 = int_to_ptr.vmem [resolvable:$true] %s17
      %20 = dma.hbm_to_vmem [thread:$0]  %s0, 32, %s18, [#allocation3]
    $region5: #{tpu_custom_call.1} parent=1 // pred_fallthru
      _
    // Predicated region
    $region6: #{tpu_custom_call.1} parent=1 // pred_check
      _
    $region7: #{tpu_custom_call.1} parent=1 // pred_check_branch
      %22 = sbr.rel (0) target = $region9
    $region8: #{tpu_custom_call.1} parent=1 // pred_region
      %s24 = ssub.s32 4096, 4096
      %25 = vsyncadd [#allocation6], %s24
      %s26 = sshll.u32 [#allocation5], 4
      %s27 = int_to_ptr.vmem [resolvable:$true] %s26
      %32 = dma.hbm_to_vmem [thread:$0]  %s1, 4096, %s27, [#allocation6], 256, 256, 16
    $region9: #{tpu_custom_call.1} parent=1 // pred_fallthru
      _
    // Predicated region
    $region10: #{tpu_custom_call.1} parent=1 // pred_check
      _
    $region11: #{tpu_custom_call.1} parent=1 // pred_check_branch
      %34 = sbr.rel (0) target = $region13
    $region12: #{tpu_custom_call.1} parent=1 // pred_region
      _
    $region13: #{tpu_custom_call.1} parent=1 // pred_fallthru
      _
    // Predicated region
    $region14: #{tpu_custom_call.1} parent=1 // pred_check
      _
    $region15: #{tpu_custom_call.1} parent=1 // pred_check_branch
      %36 = sbr.rel (0) target = $region17
    $region16: #{tpu_custom_call.1} parent=1 // pred_region
      %37 = dma.done [#allocation3], 32
    $region17: #{tpu_custom_call.1} parent=1 // pred_fallthru
      _
    // Predicated region
    $region18: #{tpu_custom_call.1} parent=1 // pred_check
      _
    $region19: #{tpu_custom_call.1} parent=1 // pred_check_branch
      %39 = sbr.rel (0) target = $region21
    $region20: #{tpu_custom_call.1} parent=1 // pred_region
      %40 = dma.done [#allocation6], 4096
    $region21: #{tpu_custom_call.1} parent=1 // pred_fallthru
      _
    %v41 = vld [vmem:[#allocation2] sm:$0x3]
    %v42 = vld [vmem:[#allocation5] sm:$0xff]
    %v43 = vld [vmem:[#allocation5 + $0x8] sm:$0xff]
    %v44 = vld [vmem:[#allocation5 + $0x10] sm:$0xff]
    %v45 = vld [vmem:[#allocation5 + $0x18] sm:$0xff]
    %v46 = vld [vmem:[#allocation5 + $0x20] sm:$0xff]
    %v47 = vld [vmem:[#allocation5 + $0x28] sm:$0xff]
    %v48 = vld [vmem:[#allocation5 + $0x30] sm:$0xff]
    %v49 = vld [vmem:[#allocation5 + $0x38] sm:$0xff]
    %v50 = vld [vmem:[#allocation5 + $0x40] sm:$0xff]
    %v51 = vld [vmem:[#allocation5 + $0x48] sm:$0xff]
    %v52 = vld [vmem:[#allocation5 + $0x50] sm:$0xff]
    %v53 = vld [vmem:[#allocation5 + $0x58] sm:$0xff]
    %v54 = vld [vmem:[#allocation5 + $0x60] sm:$0xff]
    %v55 = vld [vmem:[#allocation5 + $0x68] sm:$0xff]
    %v56 = vld [vmem:[#allocation5 + $0x70] sm:$0xff]
    %v57 = vld [vmem:[#allocation5 + $0x78] sm:$0xff]
    %v58 = vld [vmem:[#allocation5 + $0x80] sm:$0xff]
    %v59 = vld [vmem:[#allocation5 + $0x88] sm:$0xff]
    %v60 = vld [vmem:[#allocation5 + $0x90] sm:$0xff]
    %v61 = vld [vmem:[#allocation5 + $0x98] sm:$0xff]
    %v62 = vld [vmem:[#allocation5 + $0xa0] sm:$0xff]
    %v63 = vld [vmem:[#allocation5 + $0xa8] sm:$0xff]
    %v64 = vld [vmem:[#allocation5 + $0xb0] sm:$0xff]
    %v65 = vld [vmem:[#allocation5 + $0xb8] sm:$0xff]
    %v66 = vld [vmem:[#allocation5 + $0xc0] sm:$0xff]
    %v67 = vld [vmem:[#allocation5 + $0xc8] sm:$0xff]
    %v68 = vld [vmem:[#allocation5 + $0xd0] sm:$0xff]
    %v69 = vld [vmem:[#allocation5 + $0xd8] sm:$0xff]
    %v70 = vld [vmem:[#allocation5 + $0xe0] sm:$0xff]
    %v71 = vld [vmem:[#allocation5 + $0xe8] sm:$0xff]
    %v72 = vld [vmem:[#allocation5 + $0xf0] sm:$0xff]
    %v73 = vld [vmem:[#allocation5 + $0xf8] sm:$0xff]
    %v74 = vld [vmem:[%s2] sm:$0x3]
    %v76 = vlaneseq
    %v77 = vshrl.u32 %v76, 7
    %v78 = vsub.s32 0, %v77
    %v79 = vrot.slane %v74, %v78
    %v80 = vlaneseq
    %v81 = vshrl.u32 %v80, 7
    %v82 = vsub.s32 1, %v81
    %v83 = vrot.slane %v74, %v82
    %86 = vmatprep.subr.mxu0 %v43
    %87 = vmatpush1.msra.mxu0 %v42
    %88 = vmatprep.subr.mxu0 %v45
    %89 = vmatpush1.msra.mxu0 %v44
    %90 = vmatprep.subr.mxu0 %v47
    %91 = vmatpush1.msra.mxu0 %v46
    %92 = vmatprep.subr.mxu0 %v49
    %93 = vmatpush1.msra.mxu0 %v48
    %94 = vmatprep.subr.mxu0 %v51
    %95 = vmatpush1.msra.mxu0 %v50
    %96 = vmatprep.subr.mxu0 %v53
    %97 = vmatpush1.msra.mxu0 %v52
    %98 = vmatprep.subr.mxu0 %v55
    %99 = vmatpush1.msra.mxu0 %v54
    %100 = vmatprep.subr.mxu0 %v57
    %101 = vmatpush1.msra.mxu0 %v56
    %102 = vmatprep.subr.mxu0 %v59
    %103 = vmatpush1.msra.mxu0 %v58
    %104 = vmatprep.subr.mxu0 %v61
    %105 = vmatpush1.msra.mxu0 %v60
    %106 = vmatprep.subr.mxu0 %v63
    %107 = vmatpush1.msra.mxu0 %v62
    %108 = vmatprep.subr.mxu0 %v65
    %109 = vmatpush1.msra.mxu0 %v64
    %110 = vmatprep.subr.mxu0 %v67
    %111 = vmatpush1.msra.mxu0 %v66
    %112 = vmatprep.subr.mxu0 %v69
    %113 = vmatpush1.msra.mxu0 %v68
    %114 = vmatprep.subr.mxu0 %v71
    %115 = vmatpush1.msra.mxu0 %v70
    %116 = vmatprep.subr.mxu0 %v73
    %117 = vmatpush1.msra.mxu0 %v72
    %118 = vmatprep.subr.mxu0 0.0
    %119 = vmatpush1.msra.mxu0 0.0
    %120 = vmatprep.subr.mxu0 0.0
    %121 = vmatpush1.msra.mxu0 0.0
    %122 = vmatprep.subr.mxu0 0.0
    %123 = vmatpush1.msra.mxu0 0.0
    %124 = vmatprep.subr.mxu0 0.0
    %125 = vmatpush1.msra.mxu0 0.0
    %126 = vmatprep.subr.mxu0 0.0
    %127 = vmatpush1.msra.mxu0 0.0
    %128 = vmatprep.subr.mxu0 0.0
    %129 = vmatpush1.msra.mxu0 0.0
    %130 = vmatprep.subr.mxu0 0.0
    %131 = vmatpush1.msra.mxu0 0.0
    %132 = vmatprep.subr.mxu0 0.0
    %133 = vmatpush1.msra.mxu0 0.0
    %134 = vmatprep.subr.mxu0 0.0
    %135 = vmatpush1.msra.mxu0 0.0
    %136 = vmatprep.subr.mxu0 0.0
    %137 = vmatpush1.msra.mxu0 0.0
    %138 = vmatprep.subr.mxu0 0.0
    %139 = vmatpush1.msra.mxu0 0.0
    %140 = vmatprep.subr.mxu0 0.0
    %141 = vmatpush1.msra.mxu0 0.0
    %142 = vmatprep.subr.mxu0 0.0
    %143 = vmatpush1.msra.mxu0 0.0
    %144 = vmatprep.subr.mxu0 0.0
    %145 = vmatpush1.msra.mxu0 0.0
    %146 = vmatprep.subr.mxu0 0.0
    %147 = vmatpush1.msra.mxu0 0.0
    %148 = vmatprep.subr.mxu0 0.0
    %149 = vmatpush1.msra.mxu0 0.0
    %150 = vmatprep.mubr.f32.mxu0 0.0
    %151 = vmatmul.mubr.f32.gmra.mrb[0].mxu0 %v41
    %v152 = vpop.f32.mrb[0].mxu0
    %v153 = vadd.f32 %v79, %v152
    %v154 = vpop.f32.mrb[0].mxu0
    %v155 = vadd.f32 %v83, %v154
    %156 = vdwg.mxu0
    %v159 = vcombine.low %v153, %v155
    %v161 = vunpack.c.l.s4 1983009808
    %v162 = vunpack.c.0.s8 %v161
    %v163 = vlaneseq
    %v164 = vshrl.u32 %v163, 7
    %v165 = vsub.s32 %v162, %v164
    %v166 = vrot.slane %v159, %v165
    %168 = vst [vmem:[#allocation7] sm:$0xf] %v166
    // Predicated region
    $region22: #{tpu_custom_call.1} parent=1 // pred_check
      _
    $region23: #{tpu_custom_call.1} parent=1 // pred_check_branch
      %170 = sbr.rel (0) target = $region25
    $region24: #{tpu_custom_call.1} parent=1 // pred_region
      %s172 = ssub.s32 64, 64
      %173 = vsyncadd [#allocation4], %s172
      %s175 = sshll.u32 [#allocation7], 4
      %s176 = int_to_ptr.vmem [resolvable:$true] %s175
      %178 = dma.vmem_to_hbm [thread:$0]  %s176, 64, %s3, [#allocation4]
    $region25: #{tpu_custom_call.1} parent=1 // pred_fallthru
      _
    // Predicated region
    $region26: #{tpu_custom_call.1} parent=1 // pred_check
      _
    $region27: #{tpu_custom_call.1} parent=1 // pred_check_branch
      %180 = sbr.rel (0) target = $region29
    $region28: #{tpu_custom_call.1} parent=1 // pred_region
      %181 = dma.done [#allocation4], 64
    $region29: #{tpu_custom_call.1} parent=1 // pred_fallthru
      _
    %182 = vsyncpa [#allocation3], 1
    %183 = vsyncpa [#allocation6], 1
    %184 = vsyncpa [#allocation4], 1

</llo_original>
